<compile_context>
chip_gen: v7x
topology: tpu7x:2x2x1
jax: 0.10.0
libtpu: 0.0.40
codegen_flags: <defaults>
</compile_context>

<pallas_src>
import math
import functools

import jax
import jax.numpy as jnp
from jax.experimental import pallas as pl
from jax.experimental.pallas import tpu as pltpu


# ---------------------------------------------------------------------------
# Parameter / buffer setup (glue, plain JAX) — mirrors PositionalEncoding.__init__
# ---------------------------------------------------------------------------
def make_positional_encoding(d_model: int, max_len: int = 5000) -> jnp.ndarray:
    position = jnp.arange(max_len, dtype=jnp.float32)[:, None]               # (max_len, 1)
    div_term = jnp.exp(
        jnp.arange(0, d_model, 2, dtype=jnp.float32) * (-math.log(10000.0) / d_model)
    )                                                                         # (d_model/2,)
    pe = jnp.zeros((max_len, d_model), dtype=jnp.float32)
    pe = pe.at[:, 0::2].set(jnp.sin(position * div_term))
    pe = pe.at[:, 1::2].set(jnp.cos(position * div_term))
    return pe


# ---------------------------------------------------------------------------
# Tiling / device helpers
# ---------------------------------------------------------------------------
def _lane_fold_factor(S: int, D: int) -> int:
    """Fold k seq rows into the lane dim so the last dim is a multiple of 128."""
    if D % 128 == 0:
        return 1
    k = math.lcm(D, 128) // D
    return k if (k > 1 and S % k == 0) else 1


def _pick_tile_rows(s_f: int, d_f: int, itemsize: int, target_tile_bytes: int) -> int:
    """Largest multiple-of-8 row count (or full s_f) with tile <= target_tile_bytes.

    Prefers an evenly-dividing tile only if one exists *close* to the size cap;
    otherwise takes the cap with a ragged last block (Pallas masks the writeback).
    Walking down to a tiny divisor would explode grid-step count (~0.35 us/step).
    """
    max_rows = max(8, target_tile_bytes // (d_f * itemsize))
    if s_f <= max_rows:
        return s_f
    max_rows = max(8, (max_rows // 8) * 8)
    lo = max(8, ((max_rows * 3 // 4) // 8) * 8)       # only search within ~25% of the cap
    for t in range(max_rows, lo - 1, -8):
        if s_f % t == 0:
            return t
    return max_rows                                    # non-dividing: ragged last block


def _device_config():
    """(is_tpu, target_tile_bytes, vmem_limit_bytes) per TPU generation."""
    try:
        dev = jax.devices()[0]
        is_tpu = dev.platform == "tpu"
        kind = dev.device_kind.lower()
    except Exception:
        is_tpu, kind = False, ""
    if is_tpu and "v7" in kind:
        # v7x: 64 MiB VMEM/TC -> cap tiles ~2 MiB, limit <= 48 MiB, no triple-buffering.
        return True, 2 * 1024 * 1024, 48 * 1024 * 1024
    if is_tpu:
        # v5e/v6e: 128 MiB VMEM -> 4 MiB tiles / 64 MiB limit amortize per-step overhead.
        return True, 4 * 1024 * 1024, 64 * 1024 * 1024
    return False, 2 * 1024 * 1024, 32 * 1024 * 1024


# ---------------------------------------------------------------------------
# Pallas kernel: out[b, s_tile] = dropout(x[b, s_tile] + pe[s_tile])
# Grid is (S_tiles, B): batch innermost so the pe tile stays resident in VMEM.
# ---------------------------------------------------------------------------
def _pe_kernel(seed_ref, x_ref, pe_ref, o_ref, *,
               p: float, training: bool, use_hw_prng: bool,
               tile_rows: int, s_f: int, d_f: int):
    # x_ref block: (1, TS, D_f); pe_ref block: (TS, D_f); broadcast add over batch.
    y = x_ref[0] + pe_ref[...]

    if training and 0.0 < p < 1.0:
        threshold = jnp.uint32(min(int(p * (2 ** 32)), 2 ** 32 - 1))
        s = pl.program_id(0)
        b = pl.program_id(1)
        if use_hw_prng:
            # Hardware PRNG: ~1 op/vreg instead of ~15 int32 VALU ops/element.
            # Re-seeded per (seed, seq-tile, batch) -> deterministic & order-independent,
            # so the "parallel" seq-tile axis stays safe.
            pltpu.prng_seed(seed_ref[0], s, b)
            bits = pltpu.prng_random_bits(y.shape)
            if bits.dtype != jnp.uint32:
                bits = pltpu.bitcast(bits, jnp.uint32)
        else:
            # Portable fallback (non-TPU / interpreter): stateless murmur-style hash of
            # the global flat element index.  Not the perf-critical path.
            rows = jax.lax.broadcasted_iota(jnp.int32, y.shape, 0)
            cols = jax.lax.broadcasted_iota(jnp.int32, y.shape, 1)
            base = (b * s_f + s * tile_rows) * d_f
            idx = (base + rows * d_f + cols).astype(jnp.uint32)
            h = idx + seed_ref[0].astype(jnp.uint32) * jnp.uint32(0x9E3779B9)
            h = (h ^ (h >> 16)) * jnp.uint32(0x85EBCA6B)
            h = (h ^ (h >> 13)) * jnp.uint32(0xC2B2AE35)
            bits = h ^ (h >> 16)
        keep = bits >= threshold                       # unsigned compare: P(keep) = 1 - p
        y = jnp.where(keep, y * (1.0 / (1.0 - p)), jnp.zeros_like(y))

    o_ref[0] = y.astype(o_ref.dtype)


def positional_encoding_forward(x: jnp.ndarray,
                                pe: jnp.ndarray,
                                *,
                                p: float = 0.1,
                                training: bool = False,
                                seed: int = 0) -> jnp.ndarray:
    """x: (B, S, D); pe: (max_len, D). Returns dropout(x + pe[:S]) with shape (B, S, D)."""
    B, S, D = x.shape
    if training and p >= 1.0:
        # torch Dropout(p=1) zeroes everything; avoid 1/(1-p) = inf in the kernel.
        return jnp.zeros_like(x)

    pe_slice = pe[:S].astype(x.dtype)                 # glue slice + dtype match (bf16 saves DMA)

    # Lane-dense folding: (B, S, D) -> (B, S/k, k*D) so the last dim is 128-aligned.
    k = _lane_fold_factor(S, D)
    S_f, D_f = S // k, D * k
    x_f = x.reshape(B, S_f, D_f)
    pe_f = pe_slice.reshape(S_f, D_f)

    is_tpu, target_tile_bytes, vmem_limit = _device_config()
    itemsize = jnp.dtype(x.dtype).itemsize
    TS = _pick_tile_rows(S_f, D_f, itemsize, target_tile_bytes)
    # Batch is the INNER grid axis: pe's block index is constant across consecutive b
    # steps, so Pallas keeps the pe tile resident instead of re-DMAing it B times.
    grid = (pl.cdiv(S_f, TS), B)

    seed_arr = jnp.array([seed], dtype=jnp.int32)
    kernel = functools.partial(_pe_kernel, p=float(p), training=bool(training),
                               use_hw_prng=is_tpu, tile_rows=TS, s_f=S_f, d_f=D_f)

    out_f = pl.pallas_call(
        kernel,
        out_shape=jax.ShapeDtypeStruct((B, S_f, D_f), x.dtype),
        grid=grid,
        in_specs=[
            pl.BlockSpec(memory_space=pltpu.MemorySpace.SMEM),        # seed scalar
            pl.BlockSpec((1, TS, D_f), lambda s, b: (b, s, 0)),       # x tile
            pl.BlockSpec((TS, D_f), lambda s, b: (s, 0)),             # pe tile (resident over b)
        ],
        out_specs=pl.BlockSpec((1, TS, D_f), lambda s, b: (b, s, 0)),
        compiler_params=pltpu.CompilerParams(
            # Seq-tile axis parallel (long, evenly splittable -> good v7x 2-TC balance);
            # inner batch axis arbitrary.
            dimension_semantics=("parallel", "arbitrary"),
            vmem_limit_bytes=vmem_limit,
        ),
        # TODO(synk): if the caller donates x, add input_output_aliases={1: 0} to drop the
        # separate output allocation (footprint only; HBM traffic is unchanged).
    )(seed_arr, x_f, pe_f)

    return out_f.reshape(B, S, D)


# ---------------------------------------------------------------------------
# Demo / self-check
# ---------------------------------------------------------------------------
if __name__ == "__main__":
    B, S, D = 2, 8, 32
    MAX_LEN = 64
    P_DROP = 0.1

    key = jax.random.PRNGKey(0)
    x = jax.random.normal(key, (B, S, D), dtype=jnp.float32)
    pe = make_positional_encoding(D, max_len=MAX_LEN)
    ref = x + pe[:S][None, :, :]

    # Eval mode (dropout == identity): must match the reference exactly.
    out_eval = jax.block_until_ready(
        positional_encoding_forward(x, pe, p=P_DROP, training=False))
    assert out_eval.shape == (B, S, D)
    assert jnp.allclose(out_eval, ref, atol=1e-6, rtol=1e-6), "eval-mode mismatch"

    # Training mode: in-kernel inverted dropout (stochastic; check semantics/sanity).
    out_train = jax.block_until_ready(
        positional_encoding_forward(x, pe, p=P_DROP, training=True, seed=1234))
    assert out_train.shape == (B, S, D)
    zero_frac = float(jnp.mean(out_train == 0.0))
    assert 0.0 < zero_frac < 0.4, f"dropout zero fraction {zero_frac} looks wrong"
    kept = out_train != 0.0
    scaled_ref = ref * (1.0 / (1.0 - P_DROP))
    assert jnp.allclose(jnp.where(kept, out_train, 0.0),
                        jnp.where(kept, scaled_ref, 0.0),
                        atol=1e-5, rtol=1e-5), "kept values not scaled by 1/(1-p)"

    print("KERNEL_OK")
</pallas_src>

<mosaic_0001>
module attributes {stable_mosaic.version = 11 : i64} {
  func.func @_pe_kernel(%arg0: i32, %arg1: i32, %arg2: memref<1xi32, #tpu.memory_space<smem>>, %arg3: memref<1x2x128xf32, #tpu.memory_space<vmem>>, %arg4: memref<2x128xf32, #tpu.memory_space<vmem>>, %arg5: memref<1x2x128xf32, #tpu.memory_space<vmem>>) attributes {dimension_semantics = [#tpu.dimension_semantics<parallel>, #tpu.dimension_semantics<arbitrary>], iteration_bounds = array<i64: 1, 2>, scalar_prefetch = 0 : i64, scratch_operands = 0 : i64, tpu.core_type = #tpu.core_type<tc>, window_params = [{transform_indices = @transform_0, window_bounds = array<i64: 1>}, {transform_indices = @transform_1, window_bounds = array<i64: 1, 2, 128>}, {transform_indices = @transform_2, window_bounds = array<i64: 2, 128>}, {transform_indices = @transform_3, window_bounds = array<i64: 1, 2, 128>}]} {
    %c0 = arith.constant 0 : index
    %c0_0 = arith.constant 0 : index
    %c0_1 = arith.constant 0 : index
    %0 = vector.load %arg3[%c0, %c0_0, %c0_1] : memref<1x2x128xf32, #tpu.memory_space<vmem>>, vector<1x2x128xf32>
    %1 = vector.shape_cast %0 : vector<1x2x128xf32> to vector<2x128xf32>
    %c0_2 = arith.constant 0 : index
    %c0_3 = arith.constant 0 : index
    %2 = vector.load %arg4[%c0_2, %c0_3] : memref<2x128xf32, #tpu.memory_space<vmem>>, vector<2x128xf32>
    %3 = arith.addf %1, %2 : vector<2x128xf32>
    %c0_4 = arith.constant 0 : index
    %c0_5 = arith.constant 0 : index
    %c0_6 = arith.constant 0 : index
    %4 = vector.load %arg5[%c0_4, %c0_5, %c0_6] : memref<1x2x128xf32, #tpu.memory_space<vmem>>, vector<1x2x128xf32>
    %5 = vector.shape_cast %4 : vector<1x2x128xf32> to vector<2x128xf32>
    %6 = vector.shape_cast %3 : vector<2x128xf32> to vector<1x2x128xf32>
    tpu.vector_store %arg5[%c0_4, %c0_5, %c0_6], %6 {strides = array<i32>} : memref<1x2x128xf32, #tpu.memory_space<vmem>>, vector<1x2x128xf32>,
    return
  }
  func.func @transform_0(%arg0: i32, %arg1: i32) -> i32 {
    %c0_i32 = arith.constant 0 : i32
    %c0_i32_0 = arith.constant 0 : i32
    return %c0_i32 : i32
  }
  func.func @transform_1(%arg0: i32, %arg1: i32) -> (i32, i32, i32) {
    %c0_i32 = arith.constant 0 : i32
    %c0_i32_0 = arith.constant 0 : i32
    return %arg1, %arg0, %c0_i32 : i32, i32, i32
  }
  func.func @transform_2(%arg0: i32, %arg1: i32) -> (i32, i32) {
    %c0_i32 = arith.constant 0 : i32
    %c0_i32_0 = arith.constant 0 : i32
    return %arg0, %c0_i32 : i32, i32
  }
  func.func @transform_3(%arg0: i32, %arg1: i32) -> (i32, i32, i32) {
    %c0_i32 = arith.constant 0 : i32
    %c0_i32_0 = arith.constant 0 : i32
    return %arg1, %arg0, %c0_i32 : i32, i32, i32
  }
}

</mosaic_0001>

<llo_original>
// kernel: tpu_custom_call.1
$region0: #{tpu_custom_call.1}
  #allocation0 [shape = 'u32[]', space=smem, size = 0x4, offset = 0x4, fixed_abs, tag = 'smem constant byte address 0x4 - core index']
  #allocation1 [shape = 'u32[144,128]{1,0:T(1,128)}', space=vmem, size = 0x12000, scoped, tag = 'internal scratch']
  #allocation2 [shape = 's32[1]{0:T(128)S(6)}', space=smem, size = 0x200, scoped, tag = 'scoped memory for tpu_custom_call.1']
  %s0 = inlined_call_operand.<no memory space> [shape: s32[1], index: 0, kind: input, shape index: {}]
  %s1 = inlined_call_operand.hbm [shape: f32[2,2,128], index: 1, kind: input, shape index: {}]
  %s2 = inlined_call_operand.vmem [shape: f32[2,128], index: 2, kind: input, shape index: {}]
  %s3 = inlined_call_operand.hbm [shape: f32[2,2,128], index: 3, kind: output, shape index: {}]
  %s4 = sld [smem:[#allocation0]]
  $region49: #{tpu_custom_call.1} parent=0
    _
  %s6 = ssub.s32 1, %s4
  %s7 = scalar_select 0, %s6, %s4
  %8 = sst [smem:[#allocation2]] %s0
  $region1: #{tpu_custom_call.1} parent=0
    #allocation3 [shape = 'u8[2048]{0}', space=vmem, size = 0x800, scoped, tag = 'input window, operand 1']
    #allocation4 [shape = 's32[2]{0}', space=sflag, size = 0x8, scoped, tag = 'scoped memory for tpu_custom_call.1']
    #allocation5 [shape = 's32[2]{0}', space=sflag, size = 0x8, scoped, tag = 'scoped memory for tpu_custom_call.1']
    #allocation6 [shape = 'u8[2048]{0}', space=vmem, size = 0x800, scoped, tag = 'output window, operand 0']
    %9 = vsyncpa [#allocation4], 0
    %s10 = scalar_lea.sflag [#allocation4], 1
    %11 = vsyncpa %s10, 0
    %12 = vsyncpa [#allocation5], 0
    %s13 = scalar_lea.sflag [#allocation5], 1
    %14 = vsyncpa %s13, 0
    loop: start=0, step=1, limit=4
    $region2: #{tpu_custom_call.1} parent=1 // loop_pre_header
      _
    $region3: #{tpu_custom_call.1} parent=1 // loop_header
      %s16 = sphi 0, %s20
      %p17 = scmp.ge.s32.totalorder %s16, 4
      %s23 = sphi 0, %s35
      %s24 = sphi 0, %s31
      %s25 = sphi 0, %s23
      %s26 = sphi 0, %s24
      %s27 = sphi 0, %s25
      %s28 = sphi 0, %s26
      %s36 = sphi 0, %s36
      %s38 = sphi 0, %s36
      %s39 = sphi 0, %s38
      %s53 = sphi 0, %s39
      %s61 = sphi 0, %s63
      %s64 = sphi 0, %s61
      %s65 = sphi 0, %s64
      %s81 = sphi 0, %s65
      %s87 = sphi 0, %s89
      %s90 = sphi 0, %s87
      %s91 = sphi 0, %s90
      %s107 = sphi 0, %s91
      %s115 = sphi 0, %s117
      %s118 = sphi 0, %s115
      %s119 = sphi 0, %s118
      %s135 = sphi 0, %s119
    $region4: #{tpu_custom_call.1} parent=1 // loop_header_branch
      %19 = sbr.rel (%p17) target = $region8
    $region5: #{tpu_custom_call.1} parent=1 // loop_body
      %s21 = ssub.s32 %s16, 1
      %s22 = ssub.s32 %s16, 2
      %s29 = sadd.s32 1, %s24
      %p30 = scmp.ge.s32.totalorder %s29, 2
      %s31 = scalar_select %p30, 0, %s29
      %s32 = sadd.s32 1, %s23
      %s33 = scalar_select %p30, %s32, %s23
      %p34 = scmp.ge.s32.totalorder %s33, 1
      %s35 = scalar_select %p34, 0, %s33
      %s37 = sadd.s32 %s36, 1
      %p40 = scmp.eq.s32.totalorder %s16, 1
      %p41 = scmp.ne.s32.totalorder %s36, %s38
      %p42 = scmp.eq.s32.totalorder %s16, 0
      %p43 = por %p41, %p42
      %p44 = scmp.ne.s32.totalorder %s36, %s38
      %p45 = scmp.eq.s32.totalorder %s21, 1
      %p46 = por %p44, %p45
      %p47 = scmp.ne.s32.totalorder %s38, %s39
      %p48 = scmp.eq.s32.totalorder %s21, 0
      %p49 = por %p47, %p48
      %p50 = scmp.ne.s32.totalorder %s38, %s39
      %p51 = scmp.eq.s32.totalorder %s22, 1
      %p52 = por %p50, %p51
      %p54 = scmp.ne.s32.totalorder %s39, %s53
      %p55 = scmp.eq.s32.totalorder %s22, 0
      %p56 = por %p54, %p55
      %s57 = ssub.s32 %s24, %s31
      %s58 = ssub.s32 %s23, %s35
      %s59 = sor.u32 %s57, %s58
      %p60 = scmp.eq.s32.totalorder %s59, 0
      %s62 = sadd.s32 %s61, 1
      %s63 = scalar_select %p60, %s61, %s62
      %p66 = pneg %p60
      %p67 = scmp.eq.s32.totalorder %s16, 1
      %p68 = por %p66, %p67
      %p69 = scmp.ne.s32.totalorder %s61, %s64
      %p70 = scmp.eq.s32.totalorder %s16, 0
      %p71 = por %p69, %p70
      %p72 = scmp.ne.s32.totalorder %s61, %s64
      %p73 = scmp.eq.s32.totalorder %s21, 1
      %p74 = por %p72, %p73
      %p75 = scmp.ne.s32.totalorder %s64, %s65
      %p76 = scmp.eq.s32.totalorder %s21, 0
      %p77 = por %p75, %p76
      %p78 = scmp.ne.s32.totalorder %s64, %s65
      %p79 = scmp.eq.s32.totalorder %s22, 1
      %p80 = por %p78, %p79
      %p82 = scmp.ne.s32.totalorder %s65, %s81
      %p83 = scmp.eq.s32.totalorder %s22, 0
      %p84 = por %p82, %p83
      %s85 = ssub.s32 %s23, %s35
      %p86 = scmp.eq.s32.totalorder %s85, 0
      %s88 = sadd.s32 %s87, 1
      %s89 = scalar_select %p86, %s87, %s88
      %p92 = pneg %p86
      %p93 = scmp.eq.s32.totalorder %s16, 1
      %p94 = por %p92, %p93
      %p95 = scmp.ne.s32.totalorder %s87, %s90
      %p96 = scmp.eq.s32.totalorder %s16, 0
      %p97 = por %p95, %p96
      %p98 = scmp.ne.s32.totalorder %s87, %s90
      %p99 = scmp.eq.s32.totalorder %s21, 1
      %p100 = por %p98, %p99
      %p101 = scmp.ne.s32.totalorder %s90, %s91
      %p102 = scmp.eq.s32.totalorder %s21, 0
      %p103 = por %p101, %p102
      %p104 = scmp.ne.s32.totalorder %s90, %s91
      %p105 = scmp.eq.s32.totalorder %s22, 1
      %p106 = por %p104, %p105
      %p108 = scmp.ne.s32.totalorder %s91, %s107
      %p109 = scmp.eq.s32.totalorder %s22, 0
      %p110 = por %p108, %p109
      %s111 = ssub.s32 %s24, %s31
      %s112 = ssub.s32 %s23, %s35
      %s113 = sor.u32 %s111, %s112
      %p114 = scmp.eq.s32.totalorder %s113, 0
      %s116 = sadd.s32 %s115, 1
      %s117 = scalar_select %p114, %s115, %s116
      %p120 = pneg %p114
      %p121 = scmp.eq.s32.totalorder %s16, 1
      %p122 = por %p120, %p121
      %p123 = scmp.ne.s32.totalorder %s115, %s118
      %p124 = scmp.eq.s32.totalorder %s16, 0
      %p125 = por %p123, %p124
      %p126 = scmp.ne.s32.totalorder %s115, %s118
      %p127 = scmp.eq.s32.totalorder %s21, 1
      %p128 = por %p126, %p127
      %p129 = scmp.ne.s32.totalorder %s118, %s119
      %p130 = scmp.eq.s32.totalorder %s21, 0
      %p131 = por %p129, %p130
      %p132 = scmp.ne.s32.totalorder %s118, %s119
      %p133 = scmp.eq.s32.totalorder %s22, 1
      %p134 = por %p132, %p133
      %p136 = scmp.ne.s32.totalorder %s119, %s135
      %p137 = scmp.eq.s32.totalorder %s22, 0
      %p138 = por %p136, %p137
      %p139 = scmp.le.s32.totalorder 1, %s16
      %p140 = scmp.lt.s32.totalorder %s16, 3
      %p141 = pnand %p139, %p140
      %p142 = pneg %p141
      // Predicated region
      $region9: #{tpu_custom_call.1} parent=5 // pred_check
        _
      $region10: #{tpu_custom_call.1} parent=5 // pred_check_branch
        %144 = sbr.rel (%p141) target = $region12
      $region11: #{tpu_custom_call.1} parent=5 // pred_region
        %s145 = ssub.s32 %s16, 1
        // Predicated region
        $region13: #{tpu_custom_call.1} parent=11 // pred_check
          %p146 = pneg %p49
        $region14: #{tpu_custom_call.1} parent=11 // pred_check_branch
          %148 = sbr.rel (%p146) target = $region16
        $region15: #{tpu_custom_call.1} parent=11 // pred_region
          _
        $region16: #{tpu_custom_call.1} parent=11 // pred_fallthru
          _
        // Predicated region
        $region17: #{tpu_custom_call.1} parent=11 // pred_check
          %p149 = pneg %p103
        $region18: #{tpu_custom_call.1} parent=11 // pred_check_branch
          %151 = sbr.rel (%p149) target = $region20
        $region19: #{tpu_custom_call.1} parent=11 // pred_region
          %p152 = scmp.lt.s32.totalorder %s25, 0
          %s153 = scalar_select %p152, %s25, 0
          %s154 = smul.addr %s153, 2
          %s155 = scalar_lea.vmem %s2, %s154
        $region20: #{tpu_custom_call.1} parent=11 // pred_fallthru
          _
      $region12: #{tpu_custom_call.1} parent=5 // pred_fallthru
        _
      %p156 = scmp.lt.s32.totalorder %s16, 2
      // Predicated region
      $region21: #{tpu_custom_call.1} parent=5 // pred_check
        %p157 = pneg %p156
      $region22: #{tpu_custom_call.1} parent=5 // pred_check_branch
        %159 = sbr.rel (%p157) target = $region24
      $region23: #{tpu_custom_call.1} parent=5 // pred_region
        // Predicated region
        $region25: #{tpu_custom_call.1} parent=23 // pred_check
          %p160 = pneg %p71
        $region26: #{tpu_custom_call.1} parent=23 // pred_check_branch
          %162 = sbr.rel (%p160) target = $region28
        $region27: #{tpu_custom_call.1} parent=23 // pred_region
          %s163 = sand.u32 %s61, 1
          %s164 = scalar_lea.sflag [#allocation4], %s163
          %s165 = sand.u32 %s61, 1
          %s166 = smul.addr %s165, 2
          %s167 = scalar_lea.vmem [#allocation3], %s166
          %s169 = ssub.s32 32, 32
          %170 = vsyncadd %s164, %s169
          %s171 = sadd.s32 %s23, %s24
          %s172 = smul.addr %s171, 32
          %s173 = scalar_lea.hbm %s1, %s172
          %s175 = sshll.u32 %s167, 4
          %s176 = int_to_ptr.vmem [resolvable:$true] %s175
          %178 = dma.hbm_to_vmem [thread:$0]  %s173, 32, %s176, %s164
        $region28: #{tpu_custom_call.1} parent=23 // pred_fallthru
          _
      $region24: #{tpu_custom_call.1} parent=5 // pred_fallthru
        _
      %p179 = scmp.le.s32.totalorder 1, %s16
      %p180 = scmp.lt.s32.totalorder %s16, 3
      %p181 = pnand %p179, %p180
      %p182 = pneg %p181
      // Predicated region
      $region29: #{tpu_custom_call.1} parent=5 // pred_check
        _
      $region30: #{tpu_custom_call.1} parent=5 // pred_check_branch
        %184 = sbr.rel (%p181) target = $region32
      $region31: #{tpu_custom_call.1} parent=5 // pred_region
        %s185 = ssub.s32 %s16, 1
        %s186 = sand.u32 %s64, 1
        %s187 = scalar_lea.sflag [#allocation4], %s186
        %s188 = sand.u32 %s64, 1
        %s189 = smul.addr %s188, 2
        %s190 = scalar_lea.vmem [#allocation3], %s189
        // Predicated region
        $region33: #{tpu_custom_call.1} parent=31 // pred_check
          %p191 = pneg %p77
        $region34: #{tpu_custom_call.1} parent=31 // pred_check_branch
          %193 = sbr.rel (%p191) target = $region36
        $region35: #{tpu_custom_call.1} parent=31 // pred_region
          %194 = dma.done %s187, 32
        $region36: #{tpu_custom_call.1} parent=31 // pred_fallthru
          _
        %p195 = pneg %p49
        %p196 = pneg %p46
        %s197 = sand.u32 %s64, 1
        %s198 = scalar_lea.sflag [#allocation4], %s197
        %s199 = sand.u32 %s64, 1
        %s200 = smul.addr %s199, 2
        %s201 = scalar_lea.vmem [#allocation3], %s200
        %p202 = pneg %p77
        %p203 = pneg %p74
        %p204 = scmp.lt.s32.totalorder %s25, 0
        %s205 = scalar_select %p204, %s25, 0
        %s206 = smul.addr %s205, 2
        %s207 = scalar_lea.vmem %s2, %s206
        %p208 = pneg %p103
        %p209 = pneg %p100
        %p210 = pneg %p131
        %p211 = pneg %p128
        %s212 = sand.u32 %s118, 1
        %s213 = scalar_lea.sflag [#allocation5], %s212
        %s214 = sand.u32 %s118, 1
        %s215 = smul.addr %s214, 2
        %s216 = scalar_lea.vmem [#allocation6], %s215
        %p217 = scmp.lt.s32.totalorder %s25, 0
        %s218 = scalar_select %p217, %s25, 0
        %s219 = smul.addr %s218, 2
        %s220 = scalar_lea.vmem %s2, %s219
        %v221 = vld [vmem:[%s190] sm:$0x3]
        %v222 = vld [vmem:[%s220] sm:$0x3]
        %v223 = vadd.f32 %v221, %v222
        %224 = vst [vmem:[%s216] sm:$0x3] %v223
        %s225 = sand.u32 %s118, 1
        %s226 = scalar_lea.sflag [#allocation5], %s225
        %s227 = sand.u32 %s118, 1
        %s228 = smul.addr %s227, 2
        %s229 = scalar_lea.vmem [#allocation6], %s228
        // Predicated region
        $region37: #{tpu_custom_call.1} parent=31 // pred_check
          %p230 = pneg %p128
        $region38: #{tpu_custom_call.1} parent=31 // pred_check_branch
          %232 = sbr.rel (%p230) target = $region40
        $region39: #{tpu_custom_call.1} parent=31 // pred_region
          %s234 = ssub.s32 32, 32
          %235 = vsyncadd %s226, %s234
          %s236 = sadd.s32 %s25, %s26
          %s237 = smul.addr %s236, 32
          %s238 = scalar_lea.hbm %s3, %s237
          %s240 = sshll.u32 %s229, 4
          %s241 = int_to_ptr.vmem [resolvable:$true] %s240
          %243 = dma.vmem_to_hbm [thread:$0]  %s241, 32, %s238, %s226
        $region40: #{tpu_custom_call.1} parent=31 // pred_fallthru
          _
      $region32: #{tpu_custom_call.1} parent=5 // pred_fallthru
        _
      %p244 = scmp.le.s32.totalorder 2, %s16
      // Predicated region
      $region41: #{tpu_custom_call.1} parent=5 // pred_check
        %p245 = pneg %p244
      $region42: #{tpu_custom_call.1} parent=5 // pred_check_branch
        %247 = sbr.rel (%p245) target = $region44
      $region43: #{tpu_custom_call.1} parent=5 // pred_region
        %s248 = ssub.s32 %s16, 2
        // Predicated region
        $region45: #{tpu_custom_call.1} parent=43 // pred_check
          %p249 = pneg %p134
        $region46: #{tpu_custom_call.1} parent=43 // pred_check_branch
          %251 = sbr.rel (%p249) target = $region48
        $region47: #{tpu_custom_call.1} parent=43 // pred_region
          %s252 = sand.u32 %s119, 1
          %s253 = scalar_lea.sflag [#allocation5], %s252
          %s254 = sand.u32 %s119, 1
          %s255 = smul.addr %s254, 2
          %s256 = scalar_lea.vmem [#allocation6], %s255
          %257 = dma.done %s253, 32
        $region48: #{tpu_custom_call.1} parent=43 // pred_fallthru
          _
      $region44: #{tpu_custom_call.1} parent=5 // pred_fallthru
        _
    $region6: #{tpu_custom_call.1} parent=1 // loop_footer
      %s20 = sadd.s32 1, %s16
    $region7: #{tpu_custom_call.1} parent=1 // loop_footer_branch
      %15 = sbr.rel target = $region3
    $region8: #{tpu_custom_call.1} parent=1 // loop_exit
      _
    %258 = vsyncpa [#allocation4], 1
    %s259 = scalar_lea.sflag [#allocation4], 1
    %260 = vsyncpa %s259, 1
    %261 = vsyncpa [#allocation5], 1
    %s262 = scalar_lea.sflag [#allocation5], 1
    %263 = vsyncpa %s262, 1

</llo_original>
